<compile_context>
chip_gen: v7x
topology: tpu7x:2x2x1
jax: 0.10.0
libtpu: 0.0.40
codegen_flags: <defaults>
</compile_context>

<pallas_src>
import jax
import jax.numpy as jnp
from jax.experimental import pallas as pl
from jax.experimental.pallas import tpu as pltpu

HIDDEN = 256


def _critic_kernel(x_ref, w1_ref, b1_ref, w2_ref, b2_ref, w3_ref, b3_ref,
                   q_ref):
    """One batch tile: all three Linear layers + ReLUs fused."""
    # Layer 1: single K=(state_dim+action_dim) bf16 dot, f32 accumulate.
    h1 = jnp.dot(x_ref[...], w1_ref[...], preferred_element_type=jnp.float32)
    h1 = jnp.maximum(h1 + b1_ref[...], 0.0)

    # Layer 2: bf16 operands, f32 accumulate.
    h2 = jnp.dot(h1.astype(jnp.bfloat16), w2_ref[...],
                 preferred_element_type=jnp.float32)
    h2 = jnp.maximum(h2 + b2_ref[...], 0.0)

    # Layer 3 (256 -> 1): VPU multiply + XLU lane reduction (free filler under
    # the MXU-bound regime; an N=1 MXU dot would add a full extra MXU pass).
    q = jnp.sum(h2 * w3_ref[...], axis=-1) + b3_ref[0, 0]          # (TM,)
    q_ref[...] = q[None, :].astype(q_ref.dtype)                    # (1, TM)


def _round_up(x, m):
    return ((x + m - 1) // m) * m


def _round_down(x, m):
    return (x // m) * m


def critic_forward(s, a, params, *, tm=4096):
    """Pallas-backed Critic.forward(s, a) -> (B, 1) Q-values."""
    w1, b1, w2, b2, w3, b3 = params

    batch = s.shape[0]
    in_dim = w1.shape[0]
    hidden = w2.shape[0]

    # --- batch tile selection -------------------------------------------
    b128 = _round_up(batch, 128)
    tm = min(tm, b128)
    if tm == b128 and b128 >= 256:
        # Would be a single grid step: split so the "parallel" axis can feed
        # both v7x TensorCores (no-op on v5e/v6e).
        tm = max(128, _round_down(b128 // 2, 128))
    b_pad = _round_up(batch, tm)
    num_tiles = b_pad // tm

    # --- pack inputs: concat-free layer 1 becomes one contiguous operand --
    x = jnp.concatenate([s, a], axis=1).astype(jnp.bfloat16)       # (B, in_dim)
    if b_pad != batch:
        # Only the ragged tail rows are padded; they're sliced away below.
        x = jnp.pad(x, ((0, b_pad - batch), (0, 0)))

    # Constant index_maps -> weights/biases stay VMEM-resident across tiles.
    const = lambda shape: pl.BlockSpec(shape, lambda i: (0, 0))

    q_lanes = pl.pallas_call(
        _critic_kernel,
        out_shape=jax.ShapeDtypeStruct((1, b_pad), jnp.float32),
        grid=(num_tiles,),
        in_specs=[
            pl.BlockSpec((tm, in_dim), lambda i: (i, 0)),        # packed [s|a]
            const((in_dim, hidden)),                             # W1 (bf16)
            const((1, hidden)),                                  # b1 (f32)
            const((hidden, hidden)),                             # W2 (bf16)
            const((1, hidden)),                                  # b2 (f32)
            const((1, hidden)),                                  # W3 row (f32)
            pl.BlockSpec(memory_space=pltpu.MemorySpace.SMEM),   # b3 scalar
        ],
        out_specs=pl.BlockSpec((1, tm), lambda i: (0, i)),
        compiler_params=pltpu.CompilerParams(
            dimension_semantics=("parallel",),
            vmem_limit_bytes=32 * 1024 * 1024),
    )(x, w1, b1, w2, b2, w3, b3)

    return q_lanes[0, :batch].reshape(batch, 1)


def init_params(key, state_dim, action_dim, hidden=HIDDEN):
    """Deterministic synthetic parameters (PyTorch-style uniform fan-in init).
    Weights are stored transposed as (in, out); W1/W2 are stored bf16 (MXU
    operands), biases and the (1, hidden) W3 row stay f32."""
    ks = jax.random.split(key, 6)
    in_dim = state_dim + action_dim

    def uni(k, shape, fan_in):
        bound = 1.0 / jnp.sqrt(jnp.float32(fan_in))
        return jax.random.uniform(k, shape, jnp.float32, -bound, bound)

    w1 = uni(ks[0], (in_dim, hidden), in_dim).astype(jnp.bfloat16)
    b1 = uni(ks[1], (1, hidden), in_dim)
    w2 = uni(ks[2], (hidden, hidden), hidden).astype(jnp.bfloat16)
    b2 = uni(ks[3], (1, hidden), hidden)
    w3 = uni(ks[4], (1, hidden), hidden)
    b3 = uni(ks[5], (1, 1), hidden)
    return (w1, b1, w2, b2, w3, b3)


def critic_reference(s, a, params):
    """Pure-JAX f32 reference (same bf16-rounded weights, f32 math)."""
    w1, b1, w2, b2, w3, b3 = params
    x = jnp.concatenate([s, a], axis=1)
    h1 = jnp.maximum(x @ w1.astype(jnp.float32) + b1, 0.0)
    h2 = jnp.maximum(h1 @ w2.astype(jnp.float32) + b2, 0.0)
    return h2 @ w3.T + b3


if __name__ == "__main__":
    key = jax.random.PRNGKey(0)
    k_s, k_a, k_p = jax.random.split(key, 3)

    batch, state_dim, action_dim = 4, 16, 8
    s = jax.random.normal(k_s, (batch, state_dim), jnp.float32)
    a = jax.random.normal(k_a, (batch, action_dim), jnp.float32)
    params = init_params(k_p, state_dim, action_dim)

    q = critic_forward(s, a, params)
    q = jax.block_until_ready(q)

    q_ref = critic_reference(s, a, params)
    assert q.shape == (batch, 1)
    # bf16 MXU operands (f32 accumulate): tolerance relaxed vs pure-f32 path.
    assert jnp.allclose(q, q_ref, atol=3e-2, rtol=3e-2)

    print("KERNEL_OK")
</pallas_src>

<mosaic_0001>
module attributes {stable_mosaic.version = 11 : i64} {
  func.func @_critic_kernel(%arg0: i32, %arg1: memref<128x24xbf16, #tpu.memory_space<vmem>>, %arg2: memref<24x256xbf16, #tpu.memory_space<vmem>>, %arg3: memref<1x256xf32, #tpu.memory_space<vmem>>, %arg4: memref<256x256xbf16, #tpu.memory_space<vmem>>, %arg5: memref<1x256xf32, #tpu.memory_space<vmem>>, %arg6: memref<1x256xf32, #tpu.memory_space<vmem>>, %arg7: memref<1x1xf32, #tpu.memory_space<smem>>, %arg8: memref<1x128xf32, #tpu.memory_space<vmem>>) attributes {dimension_semantics = [#tpu.dimension_semantics<parallel>], iteration_bounds = array<i64: 1>, scalar_prefetch = 0 : i64, scratch_operands = 0 : i64, tpu.core_type = #tpu.core_type<tc>, window_params = [{transform_indices = @transform_0, window_bounds = array<i64: 128, 24>}, {pipeline_mode = #tpu.pipeline_mode<synchronous>, transform_indices = @transform_1, window_bounds = array<i64: 24, 256>}, {pipeline_mode = #tpu.pipeline_mode<synchronous>, transform_indices = @transform_2, window_bounds = array<i64: 1, 256>}, {pipeline_mode = #tpu.pipeline_mode<synchronous>, transform_indices = @transform_3, window_bounds = array<i64: 256, 256>}, {pipeline_mode = #tpu.pipeline_mode<synchronous>, transform_indices = @transform_4, window_bounds = array<i64: 1, 256>}, {pipeline_mode = #tpu.pipeline_mode<synchronous>, transform_indices = @transform_5, window_bounds = array<i64: 1, 256>}, {transform_indices = @transform_6, window_bounds = array<i64: 1, 1>}, {transform_indices = @transform_7, window_bounds = array<i64: 1, 128>}]} {
    %c0 = arith.constant 0 : index
    %c0_0 = arith.constant 0 : index
    %0 = vector.load %arg1[%c0, %c0_0] : memref<128x24xbf16, #tpu.memory_space<vmem>>, vector<128x24xbf16>
    %c0_1 = arith.constant 0 : index
    %c0_2 = arith.constant 0 : index
    %1 = vector.load %arg2[%c0_1, %c0_2] : memref<24x256xbf16, #tpu.memory_space<vmem>>, vector<24x256xbf16>
    %cst = arith.constant dense<0.000000e+00> : vector<128x256xf32>
    %2 = tpu.matmul %0, %1, %cst {dimension_numbers = #tpu.dot_dimension_numbers<[1], [0], [0], [1], [0, 0, 1, 1], [], []>} : vector<128x24xbf16>, vector<24x256xbf16>, vector<128x256xf32> -> vector<128x256xf32>
    %c0_3 = arith.constant 0 : index
    %c0_4 = arith.constant 0 : index
    %3 = vector.load %arg3[%c0_3, %c0_4] : memref<1x256xf32, #tpu.memory_space<vmem>>, vector<1x256xf32>
    %4 = vector.broadcast %3 : vector<1x256xf32> to vector<128x256xf32>
    %5 = arith.addf %2, %4 : vector<128x256xf32>
    %cst_5 = arith.constant 0.000000e+00 : f32
    %6 = vector.broadcast %cst_5 : f32 to vector<128x256xf32>
    %7 = arith.maximumf %5, %6 : vector<128x256xf32>
    %8 = arith.truncf %7 : vector<128x256xf32> to vector<128x256xbf16>
    %c0_6 = arith.constant 0 : index
    %c0_7 = arith.constant 0 : index
    %9 = vector.load %arg4[%c0_6, %c0_7] : memref<256x256xbf16, #tpu.memory_space<vmem>>, vector<256x256xbf16>
    %cst_8 = arith.constant dense<0.000000e+00> : vector<128x256xf32>
    %10 = tpu.matmul %8, %9, %cst_8 {dimension_numbers = #tpu.dot_dimension_numbers<[1], [0], [0], [1], [0, 0, 1, 1], [], []>} : vector<128x256xbf16>, vector<256x256xbf16>, vector<128x256xf32> -> vector<128x256xf32>
    %c0_9 = arith.constant 0 : index
    %c0_10 = arith.constant 0 : index
    %11 = vector.load %arg5[%c0_9, %c0_10] : memref<1x256xf32, #tpu.memory_space<vmem>>, vector<1x256xf32>
    %12 = vector.broadcast %11 : vector<1x256xf32> to vector<128x256xf32>
    %13 = arith.addf %10, %12 : vector<128x256xf32>
    %cst_11 = arith.constant 0.000000e+00 : f32
    %14 = vector.broadcast %cst_11 : f32 to vector<128x256xf32>
    %15 = arith.maximumf %13, %14 : vector<128x256xf32>
    %c0_12 = arith.constant 0 : index
    %c0_13 = arith.constant 0 : index
    %16 = vector.load %arg6[%c0_12, %c0_13] : memref<1x256xf32, #tpu.memory_space<vmem>>, vector<1x256xf32>
    %17 = vector.broadcast %16 : vector<1x256xf32> to vector<128x256xf32>
    %18 = arith.mulf %15, %17 : vector<128x256xf32>
    %cst_14 = arith.constant dense<0.000000e+00> : vector<128xf32>
    %19 = vector.multi_reduction <add>, %18, %cst_14 [1] : vector<128x256xf32> to vector<128xf32>
    %c0_15 = arith.constant 0 : index
    %c0_16 = arith.constant 0 : index
    %20 = memref.load %arg7[%c0_15, %c0_16] : memref<1x1xf32, #tpu.memory_space<smem>>
    %21 = vector.broadcast %20 : f32 to vector<128xf32>
    %22 = arith.addf %19, %21 : vector<128xf32>
    %23 = vector.shape_cast %22 : vector<128xf32> to vector<1x128xf32>
    %c0_17 = arith.constant 0 : index
    %c0_18 = arith.constant 0 : index
    %24 = vector.load %arg8[%c0_17, %c0_18] : memref<1x128xf32, #tpu.memory_space<vmem>>, vector<1x128xf32>
    tpu.vector_store %arg8[%c0_17, %c0_18], %23 {strides = array<i32>} : memref<1x128xf32, #tpu.memory_space<vmem>>, vector<1x128xf32>,
    return
  }
  func.func @transform_0(%arg0: i32) -> (i32, i32) {
    %c0_i32 = arith.constant 0 : i32
    %c0_i32_0 = arith.constant 0 : i32
    return %arg0, %c0_i32 : i32, i32
  }
  func.func @transform_1(%arg0: i32) -> (i32, i32) {
    %c0_i32 = arith.constant 0 : i32
    %c0_i32_0 = arith.constant 0 : i32
    %c0_i32_1 = arith.constant 0 : i32
    return %c0_i32, %c0_i32_0 : i32, i32
  }
  func.func @transform_2(%arg0: i32) -> (i32, i32) {
    %c0_i32 = arith.constant 0 : i32
    %c0_i32_0 = arith.constant 0 : i32
    %c0_i32_1 = arith.constant 0 : i32
    return %c0_i32, %c0_i32_0 : i32, i32
  }
  func.func @transform_3(%arg0: i32) -> (i32, i32) {
    %c0_i32 = arith.constant 0 : i32
    %c0_i32_0 = arith.constant 0 : i32
    %c0_i32_1 = arith.constant 0 : i32
    return %c0_i32, %c0_i32_0 : i32, i32
  }
  func.func @transform_4(%arg0: i32) -> (i32, i32) {
    %c0_i32 = arith.constant 0 : i32
    %c0_i32_0 = arith.constant 0 : i32
    %c0_i32_1 = arith.constant 0 : i32
    return %c0_i32, %c0_i32_0 : i32, i32
  }
  func.func @transform_5(%arg0: i32) -> (i32, i32) {
    %c0_i32 = arith.constant 0 : i32
    %c0_i32_0 = arith.constant 0 : i32
    %c0_i32_1 = arith.constant 0 : i32
    return %c0_i32, %c0_i32_0 : i32, i32
  }
  func.func @transform_6(%arg0: i32) -> (i32, i32) {
    %c0_i32 = arith.constant 0 : i32
    %c0_i32_0 = arith.constant 0 : i32
    %c0_i32_1 = arith.constant 0 : i32
    return %c0_i32, %c0_i32_0 : i32, i32
  }
  func.func @transform_7(%arg0: i32) -> (i32, i32) {
    %c0_i32 = arith.constant 0 : i32
    %c0_i32_0 = arith.constant 0 : i32
    return %c0_i32, %arg0 : i32, i32
  }
}

</mosaic_0001>

<llo_original>
// kernel: tpu_custom_call.1
$region0: #{tpu_custom_call.1}
  #allocation0 [shape = 'u32[]', space=smem, size = 0x4, offset = 0x4, fixed_abs, tag = 'smem constant byte address 0x4 - core index']
  #allocation1 [shape = 'u32[144,128]{1,0:T(1,128)}', space=vmem, size = 0x12000, scoped, tag = 'internal scratch']
  #allocation2 [shape = 'f32[1,1]{1,0:T(1,128)S(6)}', space=smem, size = 0x200, scoped, tag = 'scoped memory for tpu_custom_call.1']
  %s0 = inlined_call_operand.vmem [shape: bf16[128,24], index: 0, kind: input, shape index: {}]
  %s1 = inlined_call_operand.vmem [shape: bf16[24,256], index: 1, kind: input, shape index: {}]
  %s2 = inlined_call_operand.vmem [shape: f32[1,256], index: 2, kind: input, shape index: {}]
  %s3 = inlined_call_operand.hbm [shape: bf16[256,256], index: 3, kind: input, shape index: {}]
  %s4 = inlined_call_operand.vmem [shape: f32[1,256], index: 4, kind: input, shape index: {}]
  %s5 = inlined_call_operand.vmem [shape: f32[1,256], index: 5, kind: input, shape index: {}]
  %s6 = inlined_call_operand.<no memory space> [shape: f32[1,1], index: 6, kind: input, shape index: {}]
  %s7 = inlined_call_operand.hbm [shape: f32[1,128], index: 7, kind: output, shape index: {}]
  %s8 = sld [smem:[#allocation0]]
  $region42: #{tpu_custom_call.1} parent=0
    _
  %s10 = ssub.s32 1, %s8
  %s11 = scalar_select 0, %s10, %s8
  %12 = sst [smem:[#allocation2]] %s6
  $region1: #{tpu_custom_call.1} parent=0
    #allocation3 [shape = 'u8[131072]{0}', space=vmem, size = 0x20000, scoped, tag = 'input window, operand 3, single buffered']
    #allocation4 [shape = 's32[1]{0}', space=sflag, size = 0x4, scoped, tag = 'scoped memory for tpu_custom_call.1']
    #allocation5 [shape = 's32[1]{0}', space=sflag, size = 0x4, scoped, tag = 'scoped memory for tpu_custom_call.1']
    #allocation6 [shape = 'u8[512]{0}', space=vmem, size = 0x400, scoped, tag = 'output window, operand 0, single buffered']
    %13 = vsyncpa [#allocation4], 0
    %14 = vsyncpa [#allocation5], 0
    // Predicated region
    $region2: #{tpu_custom_call.1} parent=1 // pred_check
      _
    $region3: #{tpu_custom_call.1} parent=1 // pred_check_branch
      %16 = sbr.rel (0) target = $region5
    $region4: #{tpu_custom_call.1} parent=1 // pred_region
      _
    $region5: #{tpu_custom_call.1} parent=1 // pred_fallthru
      _
    // Predicated region
    $region6: #{tpu_custom_call.1} parent=1 // pred_check
      _
    $region7: #{tpu_custom_call.1} parent=1 // pred_check_branch
      %18 = sbr.rel (0) target = $region9
    $region8: #{tpu_custom_call.1} parent=1 // pred_region
      _
    $region9: #{tpu_custom_call.1} parent=1 // pred_fallthru
      _
    // Predicated region
    $region10: #{tpu_custom_call.1} parent=1 // pred_check
      _
    $region11: #{tpu_custom_call.1} parent=1 // pred_check_branch
      %20 = sbr.rel (0) target = $region13
    $region12: #{tpu_custom_call.1} parent=1 // pred_region
      _
    $region13: #{tpu_custom_call.1} parent=1 // pred_fallthru
      _
    // Predicated region
    $region14: #{tpu_custom_call.1} parent=1 // pred_check
      _
    $region15: #{tpu_custom_call.1} parent=1 // pred_check_branch
      %22 = sbr.rel (0) target = $region17
    $region16: #{tpu_custom_call.1} parent=1 // pred_region
      %s24 = ssub.s32 4096, 4096
      %25 = vsyncadd [#allocation4], %s24
      %s26 = sshll.u32 [#allocation3], 4
      %s27 = int_to_ptr.vmem [resolvable:$true] %s26
      %32 = dma.hbm_to_vmem [thread:$0]  %s3, 4096, %s27, [#allocation4], 128, 128, 8
    $region17: #{tpu_custom_call.1} parent=1 // pred_fallthru
      _
    // Predicated region
    $region18: #{tpu_custom_call.1} parent=1 // pred_check
      _
    $region19: #{tpu_custom_call.1} parent=1 // pred_check_branch
      %34 = sbr.rel (0) target = $region21
    $region20: #{tpu_custom_call.1} parent=1 // pred_region
      _
    $region21: #{tpu_custom_call.1} parent=1 // pred_fallthru
      _
    // Predicated region
    $region22: #{tpu_custom_call.1} parent=1 // pred_check
      _
    $region23: #{tpu_custom_call.1} parent=1 // pred_check_branch
      %36 = sbr.rel (0) target = $region25
    $region24: #{tpu_custom_call.1} parent=1 // pred_region
      _
    $region25: #{tpu_custom_call.1} parent=1 // pred_fallthru
      _
    // Predicated region
    $region26: #{tpu_custom_call.1} parent=1 // pred_check
      _
    $region27: #{tpu_custom_call.1} parent=1 // pred_check_branch
      %38 = sbr.rel (0) target = $region29
    $region28: #{tpu_custom_call.1} parent=1 // pred_region
      _
    $region29: #{tpu_custom_call.1} parent=1 // pred_fallthru
      _
    // Predicated region
    $region30: #{tpu_custom_call.1} parent=1 // pred_check
      _
    $region31: #{tpu_custom_call.1} parent=1 // pred_check_branch
      %40 = sbr.rel (0) target = $region33
    $region32: #{tpu_custom_call.1} parent=1 // pred_region
      %41 = dma.done [#allocation4], 4096
    $region33: #{tpu_custom_call.1} parent=1 // pred_fallthru
      _
    %v43 = vld [vmem:[%s0] sm:$0xf]
    %v44 = vld [vmem:[%s0 + $0x4] sm:$0xf]
    %v45 = vld [vmem:[%s0 + $0x8] sm:$0xf]
    %v46 = vld [vmem:[%s0 + $0xc] sm:$0xf]
    %v47 = vld [vmem:[%s0 + $0x10] sm:$0xf]
    %v48 = vld [vmem:[%s0 + $0x14] sm:$0xf]
    %v49 = vld [vmem:[%s0 + $0x18] sm:$0xf]
    %v50 = vld [vmem:[%s0 + $0x1c] sm:$0xf]
    %v51 = vld [vmem:[%s0 + $0x20] sm:$0xf]
    %v52 = vld [vmem:[%s0 + $0x24] sm:$0xf]
    %v53 = vld [vmem:[%s0 + $0x28] sm:$0xf]
    %v54 = vld [vmem:[%s0 + $0x2c] sm:$0xf]
    %v55 = vld [vmem:[%s0 + $0x30] sm:$0xf]
    %v56 = vld [vmem:[%s0 + $0x34] sm:$0xf]
    %v57 = vld [vmem:[%s0 + $0x38] sm:$0xf]
    %v58 = vld [vmem:[%s0 + $0x3c] sm:$0xf]
    %v59 = vld [vmem:[%s1] sm:$0xff]
    %v60 = vld [vmem:[%s1 + $0x8] sm:$0xff]
    %v61 = vld [vmem:[%s1 + $0x10] sm:$0xff]
    %v62 = vld [vmem:[%s2] sm:$0x3]
    %v64 = vlaneseq
    %v65 = vshrl.u32 %v64, 7
    %v66 = vsub.s32 0, %v65
    %v67 = vrot.slane %v62, %v66
    %v68 = vlaneseq
    %v69 = vshrl.u32 %v68, 7
    %v70 = vsub.s32 1, %v69
    %v71 = vrot.slane %v62, %v70
    %v90 = vunpack.c.l.b16 %v43
    %v91 = vunpack.c.l.b16 %v44
    %v92 = vunpack.c.l.b16 %v45
    %v93 = vunpack.c.l.b16 %v46
    %v94 = vunpack.c.l.b16 %v47
    %v95 = vunpack.c.l.b16 %v48
    %v96 = vunpack.c.l.b16 %v49
    %v97 = vunpack.c.l.b16 %v50
    %v98 = vunpack.c.l.b16 %v51
    %v99 = vunpack.c.l.b16 %v52
    %v100 = vunpack.c.l.b16 %v53
    %v101 = vunpack.c.l.b16 %v54
    %v102 = vunpack.c.l.b16 %v55
    %v103 = vunpack.c.l.b16 %v56
    %v104 = vunpack.c.l.b16 %v57
    %v105 = vunpack.c.l.b16 %v58
    %v106 = vpack.c.b16 %v91, %v90
    %v107 = vpack.c.b16 %v93, %v92
    %v108 = vpack.c.b16 %v95, %v94
    %v109 = vpack.c.b16 %v97, %v96
    %v110 = vpack.c.b16 %v99, %v98
    %v111 = vpack.c.b16 %v101, %v100
    %v112 = vpack.c.b16 %v103, %v102
    %v113 = vpack.c.b16 %v105, %v104
    %v117 = vunpack.c.l.b16 %v59
    %v118 = vunpack.c.h.b16 %v59
    %v119 = vunpack.c.l.b16 %v60
    %v120 = vunpack.c.h.b16 %v60
    %v121 = vunpack.c.l.b16 %v61
    %v122 = vunpack.c.h.b16 %v61
    %v123 = vpack.c.b16 %v119, %v117
    %v124 = vpack.c.b16 %v120, %v118
    %v125 = vpack.c.b16 %v121, %v121
    %v126 = vpack.c.b16 %v122, %v122
    %vm129 = vcmask 195584
    %v131 = vsel %vm129, %v106, 0
    %v134 = vsel %vm129, %v107, 0
    %v137 = vsel %vm129, %v108, 0
    %v140 = vsel %vm129, %v109, 0
    %v143 = vsel %vm129, %v110, 0
    %v146 = vsel %vm129, %v111, 0
    %v149 = vsel %vm129, %v112, 0
    %v152 = vsel %vm129, %v113, 0
    %vm154 = vcmask 1043456
    %v156 = vsel %vm154, %v125, 0
    %v159 = vsel %vm154, %v126, 0
    %161 = vmatprep.subr.bf16.mxu0 %v124
    %162 = vmatpush1.bf16.msra.mxu0 %v123
    %163 = vmatprep.subr.bf16.mxu0 %v159
    %164 = vmatpush1.bf16.msra.mxu0 %v156
    %165 = vmatprep.subr.bf16.mxu0 0
    %166 = vmatpush1.bf16.msra.mxu0 0
    %167 = vmatprep.subr.bf16.mxu0 0
    %168 = vmatpush1.bf16.msra.mxu0 0
    %169 = vmatprep.subr.bf16.mxu0 0
    %170 = vmatpush1.bf16.msra.mxu0 0
    %171 = vmatprep.subr.bf16.mxu0 0
    %172 = vmatpush1.bf16.msra.mxu0 0
    %173 = vmatprep.subr.bf16.mxu0 0
    %174 = vmatpush1.bf16.msra.mxu0 0
    %175 = vmatprep.subr.bf16.mxu0 0
    %176 = vmatpush1.bf16.msra.mxu0 0
    %177 = vmatprep.subr.bf16.mxu0 0
    %178 = vmatpush1.bf16.msra.mxu0 0
    %179 = vmatprep.subr.bf16.mxu0 0
    %180 = vmatpush1.bf16.msra.mxu0 0
    %181 = vmatprep.subr.bf16.mxu0 0
    %182 = vmatpush1.bf16.msra.mxu0 0
    %183 = vmatprep.subr.bf16.mxu0 0
    %184 = vmatpush1.bf16.msra.mxu0 0
    %185 = vmatprep.subr.bf16.mxu0 0
    %186 = vmatpush1.bf16.msra.mxu0 0
    %187 = vmatprep.subr.bf16.mxu0 0
    %188 = vmatpush1.bf16.msra.mxu0 0
    %189 = vmatprep.subr.bf16.mxu0 0
    %190 = vmatpush1.bf16.msra.mxu0 0
    %191 = vmatprep.subr.bf16.mxu0 0
    %192 = vmatpush1.bf16.msra.mxu0 0
    %193 = vmatprep.mubr.bf16.mxu0 0
    %194 = vmatmul.mubr.bf16.gmra.mrb[0].mxu0 %v131
    %v195 = vpop.f32.mrb[0].mxu0
    %v196 = vadd.f32 %v67, %v195
    %v197 = vpop.f32.mrb[0].mxu0
    %v198 = vadd.f32 %v71, %v197
    %v199 = vpop.f32.mrb[0].mxu0
    %v200 = vadd.f32 %v67, %v199
    %v201 = vpop.f32.mrb[0].mxu0
    %v202 = vadd.f32 %v71, %v201
    %203 = vmatprep.mubr.bf16.mxu0 0
    %204 = vmatmul.mubr.bf16.gmra.mrb[0].mxu0 %v134
    %v205 = vpop.f32.mrb[0].mxu0
    %v206 = vadd.f32 %v67, %v205
    %v207 = vpop.f32.mrb[0].mxu0
    %v208 = vadd.f32 %v71, %v207
    %v209 = vpop.f32.mrb[0].mxu0
    %v210 = vadd.f32 %v67, %v209
    %v211 = vpop.f32.mrb[0].mxu0
    %v212 = vadd.f32 %v71, %v211
    %213 = vmatprep.mubr.bf16.mxu0 0
    %214 = vmatmul.mubr.bf16.gmra.mrb[0].mxu0 %v137
    %v215 = vpop.f32.mrb[0].mxu0
    %v216 = vadd.f32 %v67, %v215
    %v217 = vpop.f32.mrb[0].mxu0
    %v218 = vadd.f32 %v71, %v217
    %v219 = vpop.f32.mrb[0].mxu0
    %v220 = vadd.f32 %v67, %v219
    %v221 = vpop.f32.mrb[0].mxu0
    %v222 = vadd.f32 %v71, %v221
    %223 = vmatprep.mubr.bf16.mxu0 0
    %224 = vmatmul.mubr.bf16.gmra.mrb[0].mxu0 %v140
    %v225 = vpop.f32.mrb[0].mxu0
    %v226 = vadd.f32 %v67, %v225
    %v227 = vpop.f32.mrb[0].mxu0
    %v228 = vadd.f32 %v71, %v227
    %v229 = vpop.f32.mrb[0].mxu0
    %v230 = vadd.f32 %v67, %v229
    %v231 = vpop.f32.mrb[0].mxu0
    %v232 = vadd.f32 %v71, %v231
    %233 = vmatprep.mubr.bf16.mxu0 0
    %234 = vmatmul.mubr.bf16.gmra.mrb[0].mxu0 %v143
    %v235 = vpop.f32.mrb[0].mxu0
    %v236 = vadd.f32 %v67, %v235
    %v237 = vpop.f32.mrb[0].mxu0
    %v238 = vadd.f32 %v71, %v237
    %v239 = vpop.f32.mrb[0].mxu0
    %v240 = vadd.f32 %v67, %v239
    %v241 = vpop.f32.mrb[0].mxu0
    %v242 = vadd.f32 %v71, %v241
    %243 = vmatprep.mubr.bf16.mxu0 0
    %244 = vmatmul.mubr.bf16.gmra.mrb[0].mxu0 %v146
    %v245 = vpop.f32.mrb[0].mxu0
    %v246 = vadd.f32 %v67, %v245
    %v247 = vpop.f32.mrb[0].mxu0
    %v248 = vadd.f32 %v71, %v247
    %v249 = vpop.f32.mrb[0].mxu0
    %v250 = vadd.f32 %v67, %v249
    %v251 = vpop.f32.mrb[0].mxu0
    %v252 = vadd.f32 %v71, %v251
    %253 = vmatprep.mubr.bf16.mxu0 0
    %254 = vmatmul.mubr.bf16.gmra.mrb[0].mxu0 %v149
    %v255 = vpop.f32.mrb[0].mxu0
    %v256 = vadd.f32 %v67, %v255
    %v257 = vpop.f32.mrb[0].mxu0
    %v258 = vadd.f32 %v71, %v257
    %v259 = vpop.f32.mrb[0].mxu0
    %v260 = vadd.f32 %v67, %v259
    %v261 = vpop.f32.mrb[0].mxu0
    %v262 = vadd.f32 %v71, %v261
    %263 = vmatprep.mubr.bf16.mxu0 0
    %264 = vmatmul.mubr.bf16.gmra.mrb[0].mxu0 %v152
    %v265 = vpop.f32.mrb[0].mxu0
    %v266 = vadd.f32 %v67, %v265
    %v267 = vpop.f32.mrb[0].mxu0
    %v268 = vadd.f32 %v71, %v267
    %v269 = vpop.f32.mrb[0].mxu0
    %v270 = vadd.f32 %v67, %v269
    %v271 = vpop.f32.mrb[0].mxu0
    %v272 = vadd.f32 %v71, %v271
    %273 = vdwg.mxu0
    %v274 = vmax.f32 %v196, 0.0
    %v275 = vmax.f32 %v198, 0.0
    %v276 = vmax.f32 %v200, 0.0
    %v277 = vmax.f32 %v202, 0.0
    %v278 = vmax.f32 %v206, 0.0
    %v279 = vmax.f32 %v208, 0.0
    %v280 = vmax.f32 %v210, 0.0
    %v281 = vmax.f32 %v212, 0.0
    %v282 = vmax.f32 %v216, 0.0
    %v283 = vmax.f32 %v218, 0.0
    %v284 = vmax.f32 %v220, 0.0
    %v285 = vmax.f32 %v222, 0.0
    %v286 = vmax.f32 %v226, 0.0
    %v287 = vmax.f32 %v228, 0.0
    %v288 = vmax.f32 %v230, 0.0
    %v289 = vmax.f32 %v232, 0.0
    %v290 = vmax.f32 %v236, 0.0
    %v291 = vmax.f32 %v238, 0.0
    %v292 = vmax.f32 %v240, 0.0
    %v293 = vmax.f32 %v242, 0.0
    %v294 = vmax.f32 %v246, 0.0
    %v295 = vmax.f32 %v248, 0.0
    %v296 = vmax.f32 %v250, 0.0
    %v297 = vmax.f32 %v252, 0.0
    %v298 = vmax.f32 %v256, 0.0
    %v299 = vmax.f32 %v258, 0.0
    %v300 = vmax.f32 %v260, 0.0
    %v301 = vmax.f32 %v262, 0.0
    %v302 = vmax.f32 %v266, 0.0
    %v303 = vmax.f32 %v268, 0.0
    %v304 = vmax.f32 %v270, 0.0
    %v305 = vmax.f32 %v272, 0.0
    %v306 = vpack.c.bf16 %v276, %v274
    %v307 = vpack.c.bf16 %v277, %v275
    %v308 = vpack.c.bf16 %v280, %v278
    %v309 = vpack.c.bf16 %v281, %v279
    %v310 = vpack.c.bf16 %v284, %v282
    %v311 = vpack.c.bf16 %v285, %v283
    %v312 = vpack.c.bf16 %v288, %v286
    %v313 = vpack.c.bf16 %v289, %v287
    %v314 = vpack.c.bf16 %v292, %v290
    %v315 = vpack.c.bf16 %v293, %v291
    %v316 = vpack.c.bf16 %v296, %v294
    %v317 = vpack.c.bf16 %v297, %v295
    %v318 = vpack.c.bf16 %v300, %v298
    %v319 = vpack.c.bf16 %v301, %v299
    %v320 = vpack.c.bf16 %v304, %v302
    %v321 = vpack.c.bf16 %v305, %v303
    %v322 = vld [vmem:[#allocation3] sm:$0xff]
    %v323 = vld [vmem:[#allocation3 + $0x8] sm:$0xff]
    %v324 = vld [vmem:[#allocation3 + $0x10] sm:$0xff]
    %v325 = vld [vmem:[#allocation3 + $0x18] sm:$0xff]
    %v326 = vld [vmem:[#allocation3 + $0x20] sm:$0xff]
    %v327 = vld [vmem:[#allocation3 + $0x28] sm:$0xff]
    %v328 = vld [vmem:[#allocation3 + $0x30] sm:$0xff]
    %v329 = vld [vmem:[#allocation3 + $0x38] sm:$0xff]
    %v330 = vld [vmem:[#allocation3 + $0x40] sm:$0xff]
    %v331 = vld [vmem:[#allocation3 + $0x48] sm:$0xff]
    %v332 = vld [vmem:[#allocation3 + $0x50] sm:$0xff]
    %v333 = vld [vmem:[#allocation3 + $0x58] sm:$0xff]
    %v334 = vld [vmem:[#allocation3 + $0x60] sm:$0xff]
    %v335 = vld [vmem:[#allocation3 + $0x68] sm:$0xff]
    %v336 = vld [vmem:[#allocation3 + $0x70] sm:$0xff]
    %v337 = vld [vmem:[#allocation3 + $0x78] sm:$0xff]
    %v338 = vld [vmem:[#allocation3 + $0x80] sm:$0xff]
    %v339 = vld [vmem:[#allocation3 + $0x88] sm:$0xff]
    %v340 = vld [vmem:[#allocation3 + $0x90] sm:$0xff]
    %v341 = vld [vmem:[#allocation3 + $0x98] sm:$0xff]
    %v342 = vld [vmem:[#allocation3 + $0xa0] sm:$0xff]
    %v343 = vld [vmem:[#allocation3 + $0xa8] sm:$0xff]
    %v344 = vld [vmem:[#allocation3 + $0xb0] sm:$0xff]
    %v345 = vld [vmem:[#allocation3 + $0xb8] sm:$0xff]
    %v346 = vld [vmem:[#allocation3 + $0xc0] sm:$0xff]
    %v347 = vld [vmem:[#allocation3 + $0xc8] sm:$0xff]
    %v348 = vld [vmem:[#allocation3 + $0xd0] sm:$0xff]
    %v349 = vld [vmem:[#allocation3 + $0xd8] sm:$0xff]
    %v350 = vld [vmem:[#allocation3 + $0xe0] sm:$0xff]
    %v351 = vld [vmem:[#allocation3 + $0xe8] sm:$0xff]
    %v352 = vld [vmem:[#allocation3 + $0xf0] sm:$0xff]
    %v353 = vld [vmem:[#allocation3 + $0xf8] sm:$0xff]
    %v354 = vld [vmem:[%s4] sm:$0x3]
    %v356 = vlaneseq
    %v357 = vshrl.u32 %v356, 7
    %v358 = vsub.s32 0, %v357
    %v359 = vrot.slane %v354, %v358
    %v360 = vlaneseq
    %v361 = vshrl.u32 %v360, 7
    %v362 = vsub.s32 1, %v361
    %v363 = vrot.slane %v354, %v362
    %v398 = vunpack.c.l.b16 %v322
    %v399 = vunpack.c.h.b16 %v322
    %v400 = vunpack.c.l.b16 %v323
    %v401 = vunpack.c.h.b16 %v323
    %v402 = vunpack.c.l.b16 %v324
    %v403 = vunpack.c.h.b16 %v324
    %v404 = vunpack.c.l.b16 %v325
    %v405 = vunpack.c.h.b16 %v325
    %v406 = vunpack.c.l.b16 %v326
    %v407 = vunpack.c.h.b16 %v326
    %v408 = vunpack.c.l.b16 %v327
    %v409 = vunpack.c.h.b16 %v327
    %v410 = vunpack.c.l.b16 %v328
    %v411 = vunpack.c.h.b16 %v328
    %v412 = vunpack.c.l.b16 %v329
    %v413 = vunpack.c.h.b16 %v329
    %v414 = vunpack.c.l.b16 %v330
    %v415 = vunpack.c.h.b16 %v330
    %v416 = vunpack.c.l.b16 %v331
    %v417 = vunpack.c.h.b16 %v331
    %v418 = vunpack.c.l.b16 %v332
    %v419 = vunpack.c.h.b16 %v332
    %v420 = vunpack.c.l.b16 %v333
    %v421 = vunpack.c.h.b16 %v333
    %v422 = vunpack.c.l.b16 %v334
    %v423 = vunpack.c.h.b16 %v334
    %v424 = vunpack.c.l.b16 %v335
    %v425 = vunpack.c.h.b16 %v335
    %v426 = vunpack.c.l.b16 %v336
    %v427 = vunpack.c.h.b16 %v336
    %v428 = vunpack.c.l.b16 %v337
    %v429 = vunpack.c.h.b16 %v337
    %v430 = vunpack.c.l.b16 %v338
    %v431 = vunpack.c.h.b16 %v338
    %v432 = vunpack.c.l.b16 %v339
    %v433 = vunpack.c.h.b16 %v339
    %v434 = vunpack.c.l.b16 %v340
    %v435 = vunpack.c.h.b16 %v340
    %v436 = vunpack.c.l.b16 %v341
    %v437 = vunpack.c.h.b16 %v341
    %v438 = vunpack.c.l.b16 %v342
    %v439 = vunpack.c.h.b16 %v342
    %v440 = vunpack.c.l.b16 %v343
    %v441 = vunpack.c.h.b16 %v343
    %v442 = vunpack.c.l.b16 %v344
    %v443 = vunpack.c.h.b16 %v344
    %v444 = vunpack.c.l.b16 %v345
    %v445 = vunpack.c.h.b16 %v345
    %v446 = vunpack.c.l.b16 %v346
    %v447 = vunpack.c.h.b16 %v346
    %v448 = vunpack.c.l.b16 %v347
    %v449 = vunpack.c.h.b16 %v347
    %v450 = vunpack.c.l.b16 %v348
    %v451 = vunpack.c.h.b16 %v348
    %v452 = vunpack.c.l.b16 %v349
    %v453 = vunpack.c.h.b16 %v349
    %v454 = vunpack.c.l.b16 %v350
    %v455 = vunpack.c.h.b16 %v350
    %v456 = vunpack.c.l.b16 %v351
    %v457 = vunpack.c.h.b16 %v351
    %v458 = vunpack.c.l.b16 %v352
    %v459 = vunpack.c.h.b16 %v352
    %v460 = vunpack.c.l.b16 %v353
    %v461 = vunpack.c.h.b16 %v353
    %v462 = vpack.c.b16 %v400, %v398
    %v463 = vpack.c.b16 %v401, %v399
    %v464 = vpack.c.b16 %v404, %v402
    %v465 = vpack.c.b16 %v405, %v403
    %v466 = vpack.c.b16 %v408, %v406
    %v467 = vpack.c.b16 %v409, %v407
    %v468 = vpack.c.b16 %v412, %v410
    %v469 = vpack.c.b16 %v413, %v411
    %v470 = vpack.c.b16 %v416, %v414
    %v471 = vpack.c.b16 %v417, %v415
    %v472 = vpack.c.b16 %v420, %v418
    %v473 = vpack.c.b16 %v421, %v419
    %v474 = vpack.c.b16 %v424, %v422
    %v475 = vpack.c.b16 %v425, %v423
    %v476 = vpack.c.b16 %v428, %v426
    %v477 = vpack.c.b16 %v429, %v427
    %v478 = vpack.c.b16 %v432, %v430
    %v479 = vpack.c.b16 %v433, %v431
    %v480 = vpack.c.b16 %v436, %v434
    %v481 = vpack.c.b16 %v437, %v435
    %v482 = vpack.c.b16 %v440, %v438
    %v483 = vpack.c.b16 %v441, %v439
    %v484 = vpack.c.b16 %v444, %v442
    %v485 = vpack.c.b16 %v445, %v443
    %v486 = vpack.c.b16 %v448, %v446
    %v487 = vpack.c.b16 %v449, %v447
    %v488 = vpack.c.b16 %v452, %v450
    %v489 = vpack.c.b16 %v453, %v451
    %v490 = vpack.c.b16 %v456, %v454
    %v491 = vpack.c.b16 %v457, %v455
    %v492 = vpack.c.b16 %v460, %v458
    %v493 = vpack.c.b16 %v461, %v459
    %526 = vmatprep.subr.bf16.mxu0 %v463
    %527 = vmatpush1.bf16.msra.mxu0 %v462
    %528 = vmatprep.subr.bf16.mxu0 %v465
    %529 = vmatpush1.bf16.msra.mxu0 %v464
    %530 = vmatprep.subr.bf16.mxu0 %v467
    %531 = vmatpush1.bf16.msra.mxu0 %v466
    %532 = vmatprep.subr.bf16.mxu0 %v469
    %533 = vmatpush1.bf16.msra.mxu0 %v468
    %534 = vmatprep.subr.bf16.mxu0 %v471
    %535 = vmatpush1.bf16.msra.mxu0 %v470
    %536 = vmatprep.subr.bf16.mxu0 %v473
    %537 = vmatpush1.bf16.msra.mxu0 %v472
    %538 = vmatprep.subr.bf16.mxu0 %v475
    %539 = vmatpush1.bf16.msra.mxu0 %v474
    %540 = vmatprep.subr.bf16.mxu0 %v477
    %541 = vmatpush1.bf16.msra.mxu0 %v476
    %542 = vmatprep.subr.bf16.mxu0 %v479
    %543 = vmatpush1.bf16.msra.mxu0 %v478
    %544 = vmatprep.subr.bf16.mxu0 %v481
    %545 = vmatpush1.bf16.msra.mxu0 %v480
    %546 = vmatprep.subr.bf16.mxu0 %v483
    %547 = vmatpush1.bf16.msra.mxu0 %v482
    %548 = vmatprep.subr.bf16.mxu0 %v485
    %549 = vmatpush1.bf16.msra.mxu0 %v484
    %550 = vmatprep.subr.bf16.mxu0 %v487
    %551 = vmatpush1.bf16.msra.mxu0 %v486
    %552 = vmatprep.subr.bf16.mxu0 %v489
    %553 = vmatpush1.bf16.msra.mxu0 %v488
    %554 = vmatprep.subr.bf16.mxu0 %v491
    %555 = vmatpush1.bf16.msra.mxu0 %v490
    %556 = vmatprep.subr.bf16.mxu0 %v493
    %557 = vmatpush1.bf16.msra.mxu0 %v492
    %558 = vmatprep.mubr.bf16.mxu0 %v307
    %559 = vmatmul.mubr.bf16.gmra.mrb[0].mxu0 %v306
    %v560 = vpop.f32.mrb[0].mxu0
    %v561 = vadd.f32 %v359, %v560
    %v562 = vpop.f32.mrb[0].mxu0
    %v563 = vadd.f32 %v363, %v562
    %v564 = vpop.f32.mrb[0].mxu0
    %v565 = vadd.f32 %v359, %v564
    %v566 = vpop.f32.mrb[0].mxu0
    %v567 = vadd.f32 %v363, %v566
    %568 = vmatprep.mubr.bf16.mxu0 %v309
    %569 = vmatmul.mubr.bf16.gmra.mrb[0].mxu0 %v308
    %v570 = vpop.f32.mrb[0].mxu0
    %v571 = vadd.f32 %v359, %v570
    %v572 = vpop.f32.mrb[0].mxu0
    %v573 = vadd.f32 %v363, %v572
    %v574 = vpop.f32.mrb[0].mxu0
    %v575 = vadd.f32 %v359, %v574
    %v576 = vpop.f32.mrb[0].mxu0
    %v577 = vadd.f32 %v363, %v576
    %578 = vmatprep.mubr.bf16.mxu0 %v311
    %579 = vmatmul.mubr.bf16.gmra.mrb[0].mxu0 %v310
    %v580 = vpop.f32.mrb[0].mxu0
    %v581 = vadd.f32 %v359, %v580
    %v582 = vpop.f32.mrb[0].mxu0
    %v583 = vadd.f32 %v363, %v582
    %v584 = vpop.f32.mrb[0].mxu0
    %v585 = vadd.f32 %v359, %v584
    %v586 = vpop.f32.mrb[0].mxu0
    %v587 = vadd.f32 %v363, %v586
    %588 = vmatprep.mubr.bf16.mxu0 %v313
    %589 = vmatmul.mubr.bf16.gmra.mrb[0].mxu0 %v312
    %v590 = vpop.f32.mrb[0].mxu0
    %v591 = vadd.f32 %v359, %v590
    %v592 = vpop.f32.mrb[0].mxu0
    %v593 = vadd.f32 %v363, %v592
    %v594 = vpop.f32.mrb[0].mxu0
    %v595 = vadd.f32 %v359, %v594
    %v596 = vpop.f32.mrb[0].mxu0
    %v597 = vadd.f32 %v363, %v596
    %598 = vmatprep.mubr.bf16.mxu0 %v315
    %599 = vmatmul.mubr.bf16.gmra.mrb[0].mxu0 %v314
    %v600 = vpop.f32.mrb[0].mxu0
    %v601 = vadd.f32 %v359, %v600
    %v602 = vpop.f32.mrb[0].mxu0
    %v603 = vadd.f32 %v363, %v602
    %v604 = vpop.f32.mrb[0].mxu0
    %v605 = vadd.f32 %v359, %v604
    %v606 = vpop.f32.mrb[0].mxu0
    %v607 = vadd.f32 %v363, %v606
    %608 = vmatprep.mubr.bf16.mxu0 %v317
    %609 = vmatmul.mubr.bf16.gmra.mrb[0].mxu0 %v316
    %v610 = vpop.f32.mrb[0].mxu0
    %v611 = vadd.f32 %v359, %v610
    %v612 = vpop.f32.mrb[0].mxu0
    %v613 = vadd.f32 %v363, %v612
    %v614 = vpop.f32.mrb[0].mxu0
    %v615 = vadd.f32 %v359, %v614
    %v616 = vpop.f32.mrb[0].mxu0
    %v617 = vadd.f32 %v363, %v616
    %618 = vmatprep.mubr.bf16.mxu0 %v319
    %619 = vmatmul.mubr.bf16.gmra.mrb[0].mxu0 %v318
    %v620 = vpop.f32.mrb[0].mxu0
    %v621 = vadd.f32 %v359, %v620
    %v622 = vpop.f32.mrb[0].mxu0
    %v623 = vadd.f32 %v363, %v622
    %v624 = vpop.f32.mrb[0].mxu0
    %v625 = vadd.f32 %v359, %v624
    %v626 = vpop.f32.mrb[0].mxu0
    %v627 = vadd.f32 %v363, %v626
    %628 = vmatprep.mubr.bf16.mxu0 %v321
    %629 = vmatmul.mubr.bf16.gmra.mrb[0].mxu0 %v320
    %v630 = vpop.f32.mrb[0].mxu0
    %v631 = vadd.f32 %v359, %v630
    %v632 = vpop.f32.mrb[0].mxu0
    %v633 = vadd.f32 %v363, %v632
    %v634 = vpop.f32.mrb[0].mxu0
    %v635 = vadd.f32 %v359, %v634
    %v636 = vpop.f32.mrb[0].mxu0
    %v637 = vadd.f32 %v363, %v636
    %638 = vdwg.mxu0
    %v639 = vmax.f32 %v561, 0.0
    %v640 = vmax.f32 %v563, 0.0
    %v641 = vmax.f32 %v565, 0.0
    %v642 = vmax.f32 %v567, 0.0
    %v643 = vmax.f32 %v571, 0.0
    %v644 = vmax.f32 %v573, 0.0
    %v645 = vmax.f32 %v575, 0.0
    %v646 = vmax.f32 %v577, 0.0
    %v647 = vmax.f32 %v581, 0.0
    %v648 = vmax.f32 %v583, 0.0
    %v649 = vmax.f32 %v585, 0.0
    %v650 = vmax.f32 %v587, 0.0
    %v651 = vmax.f32 %v591, 0.0
    %v652 = vmax.f32 %v593, 0.0
    %v653 = vmax.f32 %v595, 0.0
    %v654 = vmax.f32 %v597, 0.0
    %v655 = vmax.f32 %v601, 0.0
    %v656 = vmax.f32 %v603, 0.0
    %v657 = vmax.f32 %v605, 0.0
    %v658 = vmax.f32 %v607, 0.0
    %v659 = vmax.f32 %v611, 0.0
    %v660 = vmax.f32 %v613, 0.0
    %v661 = vmax.f32 %v615, 0.0
    %v662 = vmax.f32 %v617, 0.0
    %v663 = vmax.f32 %v621, 0.0
    %v664 = vmax.f32 %v623, 0.0
    %v665 = vmax.f32 %v625, 0.0
    %v666 = vmax.f32 %v627, 0.0
    %v667 = vmax.f32 %v631, 0.0
    %v668 = vmax.f32 %v633, 0.0
    %v669 = vmax.f32 %v635, 0.0
    %v670 = vmax.f32 %v637, 0.0
    %v671 = vld [vmem:[%s5] sm:$0x3]
    %v673 = vlaneseq
    %v674 = vshrl.u32 %v673, 7
    %v675 = vsub.s32 0, %v674
    %v676 = vrot.slane %v671, %v675
    %v677 = vlaneseq
    %v678 = vshrl.u32 %v677, 7
    %v679 = vsub.s32 1, %v678
    %v680 = vrot.slane %v671, %v679
    %v683 = vmul.f32 %v639, %v676
    %v684 = vmul.f32 %v640, %v680
    %v685 = vmul.f32 %v641, %v676
    %v686 = vmul.f32 %v642, %v680
    %v687 = vmul.f32 %v643, %v676
    %v688 = vmul.f32 %v644, %v680
    %v689 = vmul.f32 %v645, %v676
    %v690 = vmul.f32 %v646, %v680
    %v691 = vmul.f32 %v647, %v676
    %v692 = vmul.f32 %v648, %v680
    %v693 = vmul.f32 %v649, %v676
    %v694 = vmul.f32 %v650, %v680
    %v695 = vmul.f32 %v651, %v676
    %v696 = vmul.f32 %v652, %v680
    %v697 = vmul.f32 %v653, %v676
    %v698 = vmul.f32 %v654, %v680
    %v699 = vmul.f32 %v655, %v676
    %v700 = vmul.f32 %v656, %v680
    %v701 = vmul.f32 %v657, %v676
    %v702 = vmul.f32 %v658, %v680
    %v703 = vmul.f32 %v659, %v676
    %v704 = vmul.f32 %v660, %v680
    %v705 = vmul.f32 %v661, %v676
    %v706 = vmul.f32 %v662, %v680
    %v707 = vmul.f32 %v663, %v676
    %v708 = vmul.f32 %v664, %v680
    %v709 = vmul.f32 %v665, %v676
    %v710 = vmul.f32 %v666, %v680
    %v711 = vmul.f32 %v667, %v676
    %v712 = vmul.f32 %v668, %v680
    %v713 = vmul.f32 %v669, %v676
    %v714 = vmul.f32 %v670, %v680
    %v715 = vadd.f32 %v683, %v684
    %716 = vadd.xlane.f32.xlu0 %v715
    %v717 = vpop.xlane.xlu0 %716
    %v718 = vadd.f32 %v685, %v686
    %719 = vadd.xlane.f32.xlu0 %v718
    %v720 = vpop.xlane.xlu0 %719
    %v721 = vadd.f32 %v687, %v688
    %722 = vadd.xlane.f32.xlu0 %v721
    %v723 = vpop.xlane.xlu0 %722
    %v724 = vadd.f32 %v689, %v690
    %725 = vadd.xlane.f32.xlu0 %v724
    %v726 = vpop.xlane.xlu0 %725
    %v727 = vadd.f32 %v691, %v692
    %728 = vadd.xlane.f32.xlu0 %v727
    %v729 = vpop.xlane.xlu0 %728
    %v730 = vadd.f32 %v693, %v694
    %731 = vadd.xlane.f32.xlu0 %v730
    %v732 = vpop.xlane.xlu0 %731
    %v733 = vadd.f32 %v695, %v696
    %734 = vadd.xlane.f32.xlu0 %v733
    %v735 = vpop.xlane.xlu0 %734
    %v736 = vadd.f32 %v697, %v698
    %737 = vadd.xlane.f32.xlu0 %v736
    %v738 = vpop.xlane.xlu0 %737
    %v739 = vadd.f32 %v699, %v700
    %740 = vadd.xlane.f32.xlu0 %v739
    %v741 = vpop.xlane.xlu0 %740
    %v742 = vadd.f32 %v701, %v702
    %743 = vadd.xlane.f32.xlu0 %v742
    %v744 = vpop.xlane.xlu0 %743
    %v745 = vadd.f32 %v703, %v704
    %746 = vadd.xlane.f32.xlu0 %v745
    %v747 = vpop.xlane.xlu0 %746
    %v748 = vadd.f32 %v705, %v706
    %749 = vadd.xlane.f32.xlu0 %v748
    %v750 = vpop.xlane.xlu0 %749
    %v751 = vadd.f32 %v707, %v708
    %752 = vadd.xlane.f32.xlu0 %v751
    %v753 = vpop.xlane.xlu0 %752
    %v754 = vadd.f32 %v709, %v710
    %755 = vadd.xlane.f32.xlu0 %v754
    %v756 = vpop.xlane.xlu0 %755
    %v757 = vadd.f32 %v711, %v712
    %758 = vadd.xlane.f32.xlu0 %v757
    %v759 = vpop.xlane.xlu0 %758
    %v760 = vadd.f32 %v713, %v714
    %761 = vadd.xlane.f32.xlu0 %v760
    %v762 = vpop.xlane.xlu0 %761
    %s763 = sld [smem:[#allocation2]]
    %v764 = vstv %s763
    %v765 = vadd.f32 %v717, %v764
    %v766 = vadd.f32 %v720, %v764
    %v767 = vadd.f32 %v723, %v764
    %v768 = vadd.f32 %v726, %v764
    %v769 = vadd.f32 %v729, %v764
    %v770 = vadd.f32 %v732, %v764
    %v771 = vadd.f32 %v735, %v764
    %v772 = vadd.f32 %v738, %v764
    %v773 = vadd.f32 %v741, %v764
    %v774 = vadd.f32 %v744, %v764
    %v775 = vadd.f32 %v747, %v764
    %v776 = vadd.f32 %v750, %v764
    %v777 = vadd.f32 %v753, %v764
    %v778 = vadd.f32 %v756, %v764
    %v779 = vadd.f32 %v759, %v764
    %v780 = vadd.f32 %v762, %v764
    %v797 = vlaneseq
    %v798 = vand.u32 %v797, 127
    %v799 = vlaneseq
    %v800 = vshrl.u32 %v799, 7
    %v801 = vsub.s32 %v798, %v800
    %v802 = vrot.slane %v765, %v801
    %v803 = vadd.s32 %v798, 4294967288
    %v804 = vlaneseq
    %v805 = vshrl.u32 %v804, 7
    %v806 = vsub.s32 %v803, %v805
    %v807 = vrot.slane %v766, %v806
    %vm808 = vcmask 130112
    %v809 = vsel %vm808, %v807, %v802
    %v810 = vadd.s32 %v798, 4294967280
    %v811 = vlaneseq
    %v812 = vshrl.u32 %v811, 7
    %v813 = vsub.s32 %v810, %v812
    %v814 = vrot.slane %v767, %v813
    %vm815 = vcmask 195712
    %v816 = vsel %vm815, %v814, %v809
    %v817 = vadd.s32 %v798, 4294967272
    %v818 = vlaneseq
    %v819 = vshrl.u32 %v818, 7
    %v820 = vsub.s32 %v817, %v819
    %v821 = vrot.slane %v768, %v820
    %vm822 = vcmask 261312
    %v823 = vsel %vm822, %v821, %v816
    %v824 = vadd.s32 %v798, 4294967264
    %v825 = vlaneseq
    %v826 = vshrl.u32 %v825, 7
    %v827 = vsub.s32 %v824, %v826
    %v828 = vrot.slane %v769, %v827
    %vm829 = vcmask 326912
    %v830 = vsel %vm829, %v828, %v823
    %v831 = vadd.s32 %v798, 4294967256
    %v832 = vlaneseq
    %v833 = vshrl.u32 %v832, 7
    %v834 = vsub.s32 %v831, %v833
    %v835 = vrot.slane %v770, %v834
    %vm836 = vcmask 392512
    %v837 = vsel %vm836, %v835, %v830
    %v838 = vadd.s32 %v798, 4294967248
    %v839 = vlaneseq
    %v840 = vshrl.u32 %v839, 7
    %v841 = vsub.s32 %v838, %v840
    %v842 = vrot.slane %v771, %v841
    %vm843 = vcmask 458112
    %v844 = vsel %vm843, %v842, %v837
    %v845 = vadd.s32 %v798, 4294967240
    %v846 = vlaneseq
    %v847 = vshrl.u32 %v846, 7
    %v848 = vsub.s32 %v845, %v847
    %v849 = vrot.slane %v772, %v848
    %vm850 = vcmask 523712
    %v851 = vsel %vm850, %v849, %v844
    %v852 = vadd.s32 %v798, 4294967232
    %v853 = vlaneseq
    %v854 = vshrl.u32 %v853, 7
    %v855 = vsub.s32 %v852, %v854
    %v856 = vrot.slane %v773, %v855
    %vm857 = vcmask 589312
    %v858 = vsel %vm857, %v856, %v851
    %v859 = vadd.s32 %v798, 4294967224
    %v860 = vlaneseq
    %v861 = vshrl.u32 %v860, 7
    %v862 = vsub.s32 %v859, %v861
    %v863 = vrot.slane %v774, %v862
    %vm864 = vcmask 654912
    %v865 = vsel %vm864, %v863, %v858
    %v866 = vadd.s32 %v798, 4294967216
    %v867 = vlaneseq
    %v868 = vshrl.u32 %v867, 7
    %v869 = vsub.s32 %v866, %v868
    %v870 = vrot.slane %v775, %v869
    %vm871 = vcmask 720512
    %v872 = vsel %vm871, %v870, %v865
    %v873 = vadd.s32 %v798, 4294967208
    %v874 = vlaneseq
    %v875 = vshrl.u32 %v874, 7
    %v876 = vsub.s32 %v873, %v875
    %v877 = vrot.slane %v776, %v876
    %vm878 = vcmask 786112
    %v879 = vsel %vm878, %v877, %v872
    %v880 = vadd.s32 %v798, 4294967200
    %v881 = vlaneseq
    %v882 = vshrl.u32 %v881, 7
    %v883 = vsub.s32 %v880, %v882
    %v884 = vrot.slane %v777, %v883
    %vm885 = vcmask 851712
    %v886 = vsel %vm885, %v884, %v879
    %v887 = vadd.s32 %v798, 4294967192
    %v888 = vlaneseq
    %v889 = vshrl.u32 %v888, 7
    %v890 = vsub.s32 %v887, %v889
    %v891 = vrot.slane %v778, %v890
    %vm892 = vcmask 917312
    %v893 = vsel %vm892, %v891, %v886
    %v894 = vadd.s32 %v798, 4294967184
    %v895 = vlaneseq
    %v896 = vshrl.u32 %v895, 7
    %v897 = vsub.s32 %v894, %v896
    %v898 = vrot.slane %v779, %v897
    %vm899 = vcmask 982912
    %v900 = vsel %vm899, %v898, %v893
    %v901 = vadd.s32 %v798, 4294967176
    %v902 = vlaneseq
    %v903 = vshrl.u32 %v902, 7
    %v904 = vsub.s32 %v901, %v903
    %v905 = vrot.slane %v780, %v904
    %vm906 = vcmask 1048512
    %v907 = vsel %vm906, %v905, %v900
    %909 = vst [vmem:[#allocation6] sm:$0x1] %v907
    // Predicated region
    $region34: #{tpu_custom_call.1} parent=1 // pred_check
      _
    $region35: #{tpu_custom_call.1} parent=1 // pred_check_branch
      %911 = sbr.rel (0) target = $region37
    $region36: #{tpu_custom_call.1} parent=1 // pred_region
      %s913 = ssub.s32 16, 16
      %914 = vsyncadd [#allocation5], %s913
      %s916 = sshll.u32 [#allocation6], 4
      %s917 = int_to_ptr.vmem [resolvable:$true] %s916
      %919 = dma.vmem_to_hbm [thread:$0]  %s917, 16, %s7, [#allocation5]
    $region37: #{tpu_custom_call.1} parent=1 // pred_fallthru
      _
    // Predicated region
    $region38: #{tpu_custom_call.1} parent=1 // pred_check
      _
    $region39: #{tpu_custom_call.1} parent=1 // pred_check_branch
      %921 = sbr.rel (0) target = $region41
    $region40: #{tpu_custom_call.1} parent=1 // pred_region
      %922 = dma.done [#allocation5], 16
    $region41: #{tpu_custom_call.1} parent=1 // pred_fallthru
      _
    %923 = vsyncpa [#allocation4], 1
    %924 = vsyncpa [#allocation5], 1

</llo_original>
